<compile_context>
chip_gen: v7x
topology: tpu7x:2x2x1
jax: 0.10.0
libtpu: 0.0.40
codegen_flags: <defaults>
</compile_context>

<pallas_src>
import functools

import jax
import jax.numpy as jnp
from jax.experimental import pallas as pl
from jax.experimental.pallas import tpu as pltpu

BN_EPS = 1e-5


def _final_head_kernel(x_ref, w1_ref, w2_ref, shift_ref, b2_ref, o_ref, *, wp):
    # x_ref:     (Cin,  Lin)   flattened replication-padded image, row pitch wp
    # w1_ref:    (Cf, 9*Cin)   3x3 conv weights, BN scale folded, tap-major K
    # w2_ref:    (Cnum, Cf)    1x1 conv weights
    # shift_ref: (Cf, 1)       folded BN shift (includes conv bias), float32
    # b2_ref:    (Cnum, 1)     final conv bias, float32
    # o_ref:     (Cnum, Lout)  Lout = H*wp  -> lane-dense channel-first output
    lout = o_ref.shape[-1]
    x = x_ref[...]                                        # (Cin, Lin)

    # im2col: tap (kh, kw) of the 3x3 window is a pure lane-offset slice of the
    # flattened padded image (offset kh*wp + kw).  One sublane-axis concat gives
    # the (9*Cin, Lout) block; a single MXU push then does the whole conv.
    taps = []
    for kh in range(3):
        for kw in range(3):
            off = kh * wp + kw
            taps.append(x[:, off:off + lout])             # (Cin, Lout)
    im2col = jnp.concatenate(taps, axis=0)                # (9*Cin, Lout)

    # 3x3 conv (+ BN scale, already folded into w1) as one matmul, f32 accum.
    y = jnp.dot(w1_ref[...], im2col,
                preferred_element_type=jnp.float32)       # (Cf, Lout)
    # BN shift (+ conv bias) then ReLU.
    h = jnp.maximum(y + shift_ref[...], 0.0)

    # dropout2d is identity in inference mode.
    # Final 1x1 conv = channel matmul + bias, lane-dense output store.
    out = jnp.dot(w2_ref[...], h.astype(w2_ref.dtype),
                  preferred_element_type=jnp.float32) + b2_ref[...]
    o_ref[...] = out.astype(o_ref.dtype)


def final_head_forward(x_nchw, params, *, compute_dtype=jnp.float32):
    """x_nchw: (N, Cin, H, W) float32.  Returns (N, Cnum, H, W) float32."""
    w1, b1, gamma, beta, mean, var, w2, b2 = (
        params["w1"], params["b1"], params["gamma"], params["beta"],
        params["mean"], params["var"], params["w2"], params["b2"])

    N, Cin, H, W = x_nchw.shape
    Cf = w1.shape[0]
    Cnum = w2.shape[0]

    # ReplicationPad2d((left=0, right=2, top=2, bottom=0)) applied directly on
    # the NCHW tensor (no layout transpose).  One extra replicated bottom row
    # keeps the kernel's flattened lane-offset slices in bounds; it never feeds
    # a valid output position.
    wp = W + 2
    x_pad = jnp.pad(x_nchw, ((0, 0), (0, 0), (2, 1), (0, 2)), mode="edge")
    lin = (H + 3) * wp
    lout = H * wp
    x_flat = x_pad.reshape(N, Cin, lin).astype(compute_dtype)

    # Fold inference BatchNorm into the conv: BN(conv(x)+b1) = conv(x)*s + shift
    inv_std = gamma / jnp.sqrt(var + BN_EPS)                       # (Cf,)
    # (Cf, Cin, 3, 3) -> (3, 3, Cin, Cf) -> (9*Cin, Cf) -> (Cf, 9*Cin), tap-major K.
    w1_mat = jnp.transpose(w1, (2, 3, 1, 0)).reshape(9 * Cin, Cf).T
    w1f = (w1_mat * inv_std[:, None]).astype(compute_dtype)        # (Cf, 9*Cin)
    shift = ((b1 - mean) * inv_std + beta).reshape(Cf, 1)          # f32
    w2_mat = w2[:, :, 0, 0].astype(compute_dtype)                  # (Cnum, Cf)
    b2_col = b2.reshape(Cnum, 1)                                   # f32

    kernel = functools.partial(_final_head_kernel, wp=wp)
    out_flat = pl.pallas_call(
        kernel,
        out_shape=jax.ShapeDtypeStruct((N, Cnum, lout), jnp.float32),
        grid_spec=pltpu.PrefetchScalarGridSpec(
            num_scalar_prefetch=0,
            grid=(N,),
            in_specs=[
                pl.BlockSpec((None, Cin, lin), lambda n: (n, 0, 0)),
                pl.BlockSpec((Cf, 9 * Cin), lambda n: (0, 0)),
                pl.BlockSpec((Cnum, Cf), lambda n: (0, 0)),
                pl.BlockSpec((Cf, 1), lambda n: (0, 0)),
                pl.BlockSpec((Cnum, 1), lambda n: (0, 0)),
            ],
            out_specs=pl.BlockSpec((None, Cnum, lout), lambda n: (n, 0, 0)),
        ),
        compiler_params=pltpu.CompilerParams(
            dimension_semantics=("parallel",),
            vmem_limit_bytes=32 * 1024 * 1024,
        ),
    )(x_flat, w1f, w2_mat, shift, b2_col)

    # (N, Cnum, H, W+2): drop the 2 garbage right columns; already NCHW.
    return out_flat.reshape(N, Cnum, H, wp)[:, :, :, :W]


def reference_forward(x_nchw, params):
    """Pure-JAX reference (same inference-mode BN semantics as the module)."""
    w1, b1, gamma, beta, mean, var, w2, b2 = (
        params["w1"], params["b1"], params["gamma"], params["beta"],
        params["mean"], params["var"], params["w2"], params["b2"])
    x = jnp.transpose(x_nchw, (0, 2, 3, 1))
    x_pad = jnp.pad(x, ((0, 0), (2, 0), (0, 2), (0, 0)), mode="edge")
    w1_hwio = jnp.transpose(w1, (2, 3, 1, 0))
    y = jax.lax.conv_general_dilated(
        x_pad, w1_hwio, window_strides=(1, 1), padding="VALID",
        dimension_numbers=("NHWC", "HWIO", "NHWC")) + b1
    y = (y - mean) / jnp.sqrt(var + BN_EPS) * gamma + beta
    y = jnp.maximum(y, 0.0)
    w2_mat = jnp.transpose(w2[:, :, 0, 0], (1, 0))
    out = jnp.einsum("nhwc,cd->nhwd", y, w2_mat) + b2
    return jnp.transpose(out, (0, 3, 1, 2))


def make_params(key, in_channels, filter_nr, num_classes):
    ks = jax.random.split(key, 8)
    scale = 0.1
    return {
        "w1": scale * jax.random.normal(ks[0], (filter_nr, in_channels, 3, 3), jnp.float32),
        "b1": scale * jax.random.normal(ks[1], (filter_nr,), jnp.float32),
        "gamma": 1.0 + scale * jax.random.normal(ks[2], (filter_nr,), jnp.float32),
        "beta": scale * jax.random.normal(ks[3], (filter_nr,), jnp.float32),
        "mean": scale * jax.random.normal(ks[4], (filter_nr,), jnp.float32),
        "var": jnp.abs(1.0 + scale * jax.random.normal(ks[5], (filter_nr,), jnp.float32)),
        "w2": scale * jax.random.normal(ks[6], (num_classes, filter_nr, 1, 1), jnp.float32),
        "b2": scale * jax.random.normal(ks[7], (num_classes,), jnp.float32),
    }


if __name__ == "__main__":
    key = jax.random.PRNGKey(0)
    kx, kp = jax.random.split(key)

    N, Cin, H, W = 2, 4, 16, 16
    filter_nr, num_classes = 32, 2

    x = jax.random.normal(kx, (N, Cin, H, W), jnp.float32)
    params = make_params(kp, Cin, filter_nr, num_classes)

    ref = reference_forward(x, params)

    # float32 operands (exact-mode, matches PyTorch semantics).
    out = final_head_forward(x, params, compute_dtype=jnp.float32)
    out = jax.block_until_ready(out)
    assert out.shape == (N, num_classes, H, W)
    assert jnp.allclose(out, ref, rtol=1e-4, atol=1e-4), "f32 mismatch vs reference"

    # bf16 operands with f32 accumulation (recommended on v6e/v7x).
    out_bf16 = final_head_forward(x, params, compute_dtype=jnp.bfloat16)
    out_bf16 = jax.block_until_ready(out_bf16)
    assert jnp.allclose(out_bf16, ref, rtol=5e-2, atol=5e-2), "bf16 mismatch vs reference"

    print("KERNEL_OK")
</pallas_src>

<mosaic_0001>
module attributes {stable_mosaic.version = 11 : i64} {
  func.func @_final_head_kernel(%arg0: i32, %arg1: memref<1x4x342xf32, #tpu.memory_space<vmem>>, %arg2: memref<32x36xf32, #tpu.memory_space<vmem>>, %arg3: memref<2x32xf32, #tpu.memory_space<vmem>>, %arg4: memref<32x1xf32, #tpu.memory_space<vmem>>, %arg5: memref<2x1xf32, #tpu.memory_space<vmem>>, %arg6: memref<1x2x288xf32, #tpu.memory_space<vmem>>) attributes {dimension_semantics = [#tpu.dimension_semantics<parallel>], iteration_bounds = array<i64: 2>, scalar_prefetch = 0 : i64, scratch_operands = 0 : i64, tpu.core_type = #tpu.core_type<tc>, window_params = [{transform_indices = @transform_0, window_bounds = array<i64: 1, 4, 342>}, {pipeline_mode = #tpu.pipeline_mode<synchronous>, transform_indices = @transform_1, window_bounds = array<i64: 32, 36>}, {pipeline_mode = #tpu.pipeline_mode<synchronous>, transform_indices = @transform_2, window_bounds = array<i64: 2, 32>}, {pipeline_mode = #tpu.pipeline_mode<synchronous>, transform_indices = @transform_3, window_bounds = array<i64: 32, 1>}, {pipeline_mode = #tpu.pipeline_mode<synchronous>, transform_indices = @transform_4, window_bounds = array<i64: 2, 1>}, {transform_indices = @transform_5, window_bounds = array<i64: 1, 2, 288>}]} {
    %c0 = arith.constant 0 : index
    %c0_0 = arith.constant 0 : index
    %c0_1 = arith.constant 0 : index
    %0 = vector.load %arg1[%c0, %c0_0, %c0_1] : memref<1x4x342xf32, #tpu.memory_space<vmem>>, vector<1x4x342xf32>
    %1 = vector.shape_cast %0 : vector<1x4x342xf32> to vector<4x342xf32>
    %2 = vector.extract_strided_slice %1 {offsets = [0, 0], sizes = [4, 288], strides = [1, 1]} : vector<4x342xf32> to vector<4x288xf32>
    %3 = vector.extract_strided_slice %1 {offsets = [0, 1], sizes = [4, 288], strides = [1, 1]} : vector<4x342xf32> to vector<4x288xf32>
    %4 = vector.extract_strided_slice %1 {offsets = [0, 2], sizes = [4, 288], strides = [1, 1]} : vector<4x342xf32> to vector<4x288xf32>
    %5 = vector.extract_strided_slice %1 {offsets = [0, 18], sizes = [4, 288], strides = [1, 1]} : vector<4x342xf32> to vector<4x288xf32>
    %6 = vector.extract_strided_slice %1 {offsets = [0, 19], sizes = [4, 288], strides = [1, 1]} : vector<4x342xf32> to vector<4x288xf32>
    %7 = vector.extract_strided_slice %1 {offsets = [0, 20], sizes = [4, 288], strides = [1, 1]} : vector<4x342xf32> to vector<4x288xf32>
    %8 = vector.extract_strided_slice %1 {offsets = [0, 36], sizes = [4, 288], strides = [1, 1]} : vector<4x342xf32> to vector<4x288xf32>
    %9 = vector.extract_strided_slice %1 {offsets = [0, 37], sizes = [4, 288], strides = [1, 1]} : vector<4x342xf32> to vector<4x288xf32>
    %10 = vector.extract_strided_slice %1 {offsets = [0, 38], sizes = [4, 288], strides = [1, 1]} : vector<4x342xf32> to vector<4x288xf32>
    %11 = tpu.concatenate %2, %3, %4, %5, %6, %7, %8, %9, %10 in 0 : vector<4x288xf32>, vector<4x288xf32>, vector<4x288xf32>, vector<4x288xf32>, vector<4x288xf32>, vector<4x288xf32>, vector<4x288xf32>, vector<4x288xf32>, vector<4x288xf32> -> vector<36x288xf32>
    %c0_2 = arith.constant 0 : index
    %c0_3 = arith.constant 0 : index
    %12 = vector.load %arg2[%c0_2, %c0_3] : memref<32x36xf32, #tpu.memory_space<vmem>>, vector<32x36xf32>
    %cst = arith.constant dense<0.000000e+00> : vector<32x288xf32>
    %13 = tpu.matmul %12, %11, %cst {dimension_numbers = #tpu.dot_dimension_numbers<[1], [0], [0], [1], [0, 0, 1, 1], [], []>} : vector<32x36xf32>, vector<36x288xf32>, vector<32x288xf32> -> vector<32x288xf32>
    %c0_4 = arith.constant 0 : index
    %c0_5 = arith.constant 0 : index
    %14 = vector.load %arg4[%c0_4, %c0_5] : memref<32x1xf32, #tpu.memory_space<vmem>>, vector<32x1xf32>
    %15 = vector.broadcast %14 : vector<32x1xf32> to vector<32x288xf32>
    %16 = arith.addf %13, %15 : vector<32x288xf32>
    %cst_6 = arith.constant 0.000000e+00 : f32
    %17 = vector.broadcast %cst_6 : f32 to vector<32x288xf32>
    %18 = arith.maximumf %16, %17 : vector<32x288xf32>
    %c0_7 = arith.constant 0 : index
    %c0_8 = arith.constant 0 : index
    %19 = vector.load %arg3[%c0_7, %c0_8] : memref<2x32xf32, #tpu.memory_space<vmem>>, vector<2x32xf32>
    %cst_9 = arith.constant dense<0.000000e+00> : vector<2x288xf32>
    %20 = tpu.matmul %19, %18, %cst_9 {dimension_numbers = #tpu.dot_dimension_numbers<[1], [0], [0], [1], [0, 0, 1, 1], [], []>} : vector<2x32xf32>, vector<32x288xf32>, vector<2x288xf32> -> vector<2x288xf32>
    %c0_10 = arith.constant 0 : index
    %c0_11 = arith.constant 0 : index
    %21 = vector.load %arg5[%c0_10, %c0_11] : memref<2x1xf32, #tpu.memory_space<vmem>>, vector<2x1xf32>
    %22 = vector.broadcast %21 : vector<2x1xf32> to vector<2x288xf32>
    %23 = arith.addf %20, %22 : vector<2x288xf32>
    %c0_12 = arith.constant 0 : index
    %c0_13 = arith.constant 0 : index
    %c0_14 = arith.constant 0 : index
    %24 = vector.load %arg6[%c0_12, %c0_13, %c0_14] : memref<1x2x288xf32, #tpu.memory_space<vmem>>, vector<1x2x288xf32>
    %25 = vector.shape_cast %24 : vector<1x2x288xf32> to vector<2x288xf32>
    %26 = vector.shape_cast %23 : vector<2x288xf32> to vector<1x2x288xf32>
    tpu.vector_store %arg6[%c0_12, %c0_13, %c0_14], %26 {strides = array<i32>} : memref<1x2x288xf32, #tpu.memory_space<vmem>>, vector<1x2x288xf32>,
    return
  }
  func.func @transform_0(%arg0: i32) -> (i32, i32, i32) {
    %c0_i32 = arith.constant 0 : i32
    %c0_i32_0 = arith.constant 0 : i32
    %c0_i32_1 = arith.constant 0 : i32
    return %arg0, %c0_i32, %c0_i32_0 : i32, i32, i32
  }
  func.func @transform_1(%arg0: i32) -> (i32, i32) {
    %c0_i32 = arith.constant 0 : i32
    %c0_i32_0 = arith.constant 0 : i32
    %c0_i32_1 = arith.constant 0 : i32
    return %c0_i32, %c0_i32_0 : i32, i32
  }
  func.func @transform_2(%arg0: i32) -> (i32, i32) {
    %c0_i32 = arith.constant 0 : i32
    %c0_i32_0 = arith.constant 0 : i32
    %c0_i32_1 = arith.constant 0 : i32
    return %c0_i32, %c0_i32_0 : i32, i32
  }
  func.func @transform_3(%arg0: i32) -> (i32, i32) {
    %c0_i32 = arith.constant 0 : i32
    %c0_i32_0 = arith.constant 0 : i32
    %c0_i32_1 = arith.constant 0 : i32
    return %c0_i32, %c0_i32_0 : i32, i32
  }
  func.func @transform_4(%arg0: i32) -> (i32, i32) {
    %c0_i32 = arith.constant 0 : i32
    %c0_i32_0 = arith.constant 0 : i32
    %c0_i32_1 = arith.constant 0 : i32
    return %c0_i32, %c0_i32_0 : i32, i32
  }
  func.func @transform_5(%arg0: i32) -> (i32, i32, i32) {
    %c0_i32 = arith.constant 0 : i32
    %c0_i32_0 = arith.constant 0 : i32
    %c0_i32_1 = arith.constant 0 : i32
    return %arg0, %c0_i32, %c0_i32_0 : i32, i32, i32
  }
}

</mosaic_0001>

<llo_original>
// kernel: tpu_custom_call.1
$region0: #{tpu_custom_call.1}
  #allocation0 [shape = 'u32[]', space=smem, size = 0x4, offset = 0x4, fixed_abs, tag = 'smem constant byte address 0x4 - core index']
  #allocation1 [shape = 'u32[144,128]{1,0:T(1,128)}', space=vmem, size = 0x12000, scoped, tag = 'internal scratch']
  %s0 = inlined_call_operand.hbm [shape: f32[2,4,342], index: 0, kind: input, shape index: {}]
  %s1 = inlined_call_operand.vmem [shape: f32[32,36], index: 1, kind: input, shape index: {}]
  %s2 = inlined_call_operand.vmem [shape: f32[2,32], index: 2, kind: input, shape index: {}]
  %s3 = inlined_call_operand.vmem [shape: f32[32,1], index: 3, kind: input, shape index: {}]
  %s4 = inlined_call_operand.vmem [shape: f32[2,1], index: 4, kind: input, shape index: {}]
  %s5 = inlined_call_operand.hbm [shape: f32[2,2,288], index: 5, kind: output, shape index: {}]
  %s6 = sld [smem:[#allocation0]]
  $region57: #{tpu_custom_call.1} parent=0
    _
  %s8 = ssub.s32 1, %s6
  %s9 = scalar_select 0, %s8, %s6
  $region1: #{tpu_custom_call.1} parent=0
    #allocation2 [shape = 'u8[12288]{0}', space=vmem, size = 0x3000, scoped, tag = 'input window, operand 0']
    #allocation3 [shape = 's32[2]{0}', space=sflag, size = 0x8, scoped, tag = 'scoped memory for tpu_custom_call.1']
    #allocation4 [shape = 's32[2]{0}', space=sflag, size = 0x8, scoped, tag = 'scoped memory for tpu_custom_call.1']
    #allocation5 [shape = 'u8[6144]{0}', space=vmem, size = 0x1800, scoped, tag = 'output window, operand 0']
    %10 = vsyncpa [#allocation3], 0
    %s11 = scalar_lea.sflag [#allocation3], 1
    %12 = vsyncpa %s11, 0
    %13 = vsyncpa [#allocation4], 0
    %s14 = scalar_lea.sflag [#allocation4], 1
    %15 = vsyncpa %s14, 0
    loop: start=0, step=1, limit=4
    $region2: #{tpu_custom_call.1} parent=1 // loop_pre_header
      _
    $region3: #{tpu_custom_call.1} parent=1 // loop_header
      %s17 = sphi 0, %s21
      %p18 = scmp.ge.s32.totalorder %s17, 4
      %s27 = sphi 0, %s29
      %s30 = sphi 0, %s27
      %s31 = sphi 0, %s30
      %s47 = sphi 0, %s31
      %s51 = sphi 0, %s51
      %s53 = sphi 0, %s51
      %s54 = sphi 0, %s53
      %s68 = sphi 0, %s54
      %s72 = sphi 0, %s72
      %s74 = sphi 0, %s72
      %s75 = sphi 0, %s74
      %s89 = sphi 0, %s75
      %s93 = sphi 0, %s93
      %s95 = sphi 0, %s93
      %s96 = sphi 0, %s95
      %s110 = sphi 0, %s96
      %s114 = sphi 0, %s114
      %s116 = sphi 0, %s114
      %s117 = sphi 0, %s116
      %s131 = sphi 0, %s117
      %s137 = sphi 0, %s139
      %s140 = sphi 0, %s137
      %s141 = sphi 0, %s140
      %s157 = sphi 0, %s141
    $region4: #{tpu_custom_call.1} parent=1 // loop_header_branch
      %20 = sbr.rel (%p18) target = $region8
    $region5: #{tpu_custom_call.1} parent=1 // loop_body
      %s22 = ssub.s32 %s17, 1
      %s23 = ssub.s32 %s17, 2
      %s24 = sadd.s32 %s17, 1
      %s25 = ssub.s32 %s17, %s24
      %p26 = scmp.eq.s32.totalorder %s25, 0
      %s28 = sadd.s32 %s27, 1
      %s29 = scalar_select %p26, %s27, %s28
      %p32 = pneg %p26
      %p33 = scmp.eq.s32.totalorder %s17, 1
      %p34 = por %p32, %p33
      %p35 = scmp.ne.s32.totalorder %s27, %s30
      %p36 = scmp.eq.s32.totalorder %s17, 0
      %p37 = por %p35, %p36
      %p38 = scmp.ne.s32.totalorder %s27, %s30
      %p39 = scmp.eq.s32.totalorder %s22, 1
      %p40 = por %p38, %p39
      %p41 = scmp.ne.s32.totalorder %s30, %s31
      %p42 = scmp.eq.s32.totalorder %s22, 0
      %p43 = por %p41, %p42
      %p44 = scmp.ne.s32.totalorder %s30, %s31
      %p45 = scmp.eq.s32.totalorder %s23, 1
      %p46 = por %p44, %p45
      %p48 = scmp.ne.s32.totalorder %s31, %s47
      %p49 = scmp.eq.s32.totalorder %s23, 0
      %p50 = por %p48, %p49
      %s52 = sadd.s32 %s51, 1
      %p55 = scmp.eq.s32.totalorder %s17, 1
      %p56 = scmp.ne.s32.totalorder %s51, %s53
      %p57 = scmp.eq.s32.totalorder %s17, 0
      %p58 = por %p56, %p57
      %p59 = scmp.ne.s32.totalorder %s51, %s53
      %p60 = scmp.eq.s32.totalorder %s22, 1
      %p61 = por %p59, %p60
      %p62 = scmp.ne.s32.totalorder %s53, %s54
      %p63 = scmp.eq.s32.totalorder %s22, 0
      %p64 = por %p62, %p63
      %p65 = scmp.ne.s32.totalorder %s53, %s54
      %p66 = scmp.eq.s32.totalorder %s23, 1
      %p67 = por %p65, %p66
      %p69 = scmp.ne.s32.totalorder %s54, %s68
      %p70 = scmp.eq.s32.totalorder %s23, 0
      %p71 = por %p69, %p70
      %s73 = sadd.s32 %s72, 1
      %p76 = scmp.eq.s32.totalorder %s17, 1
      %p77 = scmp.ne.s32.totalorder %s72, %s74
      %p78 = scmp.eq.s32.totalorder %s17, 0
      %p79 = por %p77, %p78
      %p80 = scmp.ne.s32.totalorder %s72, %s74
      %p81 = scmp.eq.s32.totalorder %s22, 1
      %p82 = por %p80, %p81
      %p83 = scmp.ne.s32.totalorder %s74, %s75
      %p84 = scmp.eq.s32.totalorder %s22, 0
      %p85 = por %p83, %p84
      %p86 = scmp.ne.s32.totalorder %s74, %s75
      %p87 = scmp.eq.s32.totalorder %s23, 1
      %p88 = por %p86, %p87
      %p90 = scmp.ne.s32.totalorder %s75, %s89
      %p91 = scmp.eq.s32.totalorder %s23, 0
      %p92 = por %p90, %p91
      %s94 = sadd.s32 %s93, 1
      %p97 = scmp.eq.s32.totalorder %s17, 1
      %p98 = scmp.ne.s32.totalorder %s93, %s95
      %p99 = scmp.eq.s32.totalorder %s17, 0
      %p100 = por %p98, %p99
      %p101 = scmp.ne.s32.totalorder %s93, %s95
      %p102 = scmp.eq.s32.totalorder %s22, 1
      %p103 = por %p101, %p102
      %p104 = scmp.ne.s32.totalorder %s95, %s96
      %p105 = scmp.eq.s32.totalorder %s22, 0
      %p106 = por %p104, %p105
      %p107 = scmp.ne.s32.totalorder %s95, %s96
      %p108 = scmp.eq.s32.totalorder %s23, 1
      %p109 = por %p107, %p108
      %p111 = scmp.ne.s32.totalorder %s96, %s110
      %p112 = scmp.eq.s32.totalorder %s23, 0
      %p113 = por %p111, %p112
      %s115 = sadd.s32 %s114, 1
      %p118 = scmp.eq.s32.totalorder %s17, 1
      %p119 = scmp.ne.s32.totalorder %s114, %s116
      %p120 = scmp.eq.s32.totalorder %s17, 0
      %p121 = por %p119, %p120
      %p122 = scmp.ne.s32.totalorder %s114, %s116
      %p123 = scmp.eq.s32.totalorder %s22, 1
      %p124 = por %p122, %p123
      %p125 = scmp.ne.s32.totalorder %s116, %s117
      %p126 = scmp.eq.s32.totalorder %s22, 0
      %p127 = por %p125, %p126
      %p128 = scmp.ne.s32.totalorder %s116, %s117
      %p129 = scmp.eq.s32.totalorder %s23, 1
      %p130 = por %p128, %p129
      %p132 = scmp.ne.s32.totalorder %s117, %s131
      %p133 = scmp.eq.s32.totalorder %s23, 0
      %p134 = por %p132, %p133
      %s135 = ssub.s32 %s17, %s24
      %p136 = scmp.eq.s32.totalorder %s135, 0
      %s138 = sadd.s32 %s137, 1
      %s139 = scalar_select %p136, %s137, %s138
      %p142 = pneg %p136
      %p143 = scmp.eq.s32.totalorder %s17, 1
      %p144 = por %p142, %p143
      %p145 = scmp.ne.s32.totalorder %s137, %s140
      %p146 = scmp.eq.s32.totalorder %s17, 0
      %p147 = por %p145, %p146
      %p148 = scmp.ne.s32.totalorder %s137, %s140
      %p149 = scmp.eq.s32.totalorder %s22, 1
      %p150 = por %p148, %p149
      %p151 = scmp.ne.s32.totalorder %s140, %s141
      %p152 = scmp.eq.s32.totalorder %s22, 0
      %p153 = por %p151, %p152
      %p154 = scmp.ne.s32.totalorder %s140, %s141
      %p155 = scmp.eq.s32.totalorder %s23, 1
      %p156 = por %p154, %p155
      %p158 = scmp.ne.s32.totalorder %s141, %s157
      %p159 = scmp.eq.s32.totalorder %s23, 0
      %p160 = por %p158, %p159
      %p161 = scmp.le.s32.totalorder 1, %s17
      %p162 = scmp.lt.s32.totalorder %s17, 3
      %p163 = pnand %p161, %p162
      %p164 = pneg %p163
      // Predicated region
      $region9: #{tpu_custom_call.1} parent=5 // pred_check
        _
      $region10: #{tpu_custom_call.1} parent=5 // pred_check_branch
        %166 = sbr.rel (%p163) target = $region12
      $region11: #{tpu_custom_call.1} parent=5 // pred_region
        %s167 = ssub.s32 %s17, 1
        // Predicated region
        $region13: #{tpu_custom_call.1} parent=11 // pred_check
          %p168 = pneg %p64
        $region14: #{tpu_custom_call.1} parent=11 // pred_check_branch
          %170 = sbr.rel (%p168) target = $region16
        $region15: #{tpu_custom_call.1} parent=11 // pred_region
          _
        $region16: #{tpu_custom_call.1} parent=11 // pred_fallthru
          _
        // Predicated region
        $region17: #{tpu_custom_call.1} parent=11 // pred_check
          %p171 = pneg %p85
        $region18: #{tpu_custom_call.1} parent=11 // pred_check_branch
          %173 = sbr.rel (%p171) target = $region20
        $region19: #{tpu_custom_call.1} parent=11 // pred_region
          _
        $region20: #{tpu_custom_call.1} parent=11 // pred_fallthru
          _
        // Predicated region
        $region21: #{tpu_custom_call.1} parent=11 // pred_check
          %p174 = pneg %p106
        $region22: #{tpu_custom_call.1} parent=11 // pred_check_branch
          %176 = sbr.rel (%p174) target = $region24
        $region23: #{tpu_custom_call.1} parent=11 // pred_region
          _
        $region24: #{tpu_custom_call.1} parent=11 // pred_fallthru
          _
        // Predicated region
        $region25: #{tpu_custom_call.1} parent=11 // pred_check
          %p177 = pneg %p127
        $region26: #{tpu_custom_call.1} parent=11 // pred_check_branch
          %179 = sbr.rel (%p177) target = $region28
        $region27: #{tpu_custom_call.1} parent=11 // pred_region
          _
        $region28: #{tpu_custom_call.1} parent=11 // pred_fallthru
          _
      $region12: #{tpu_custom_call.1} parent=5 // pred_fallthru
        _
      %p180 = scmp.lt.s32.totalorder %s17, 2
      // Predicated region
      $region29: #{tpu_custom_call.1} parent=5 // pred_check
        %p181 = pneg %p180
      $region30: #{tpu_custom_call.1} parent=5 // pred_check_branch
        %183 = sbr.rel (%p181) target = $region32
      $region31: #{tpu_custom_call.1} parent=5 // pred_region
        // Predicated region
        $region33: #{tpu_custom_call.1} parent=31 // pred_check
          %p184 = pneg %p37
        $region34: #{tpu_custom_call.1} parent=31 // pred_check_branch
          %186 = sbr.rel (%p184) target = $region36
        $region35: #{tpu_custom_call.1} parent=31 // pred_region
          %s187 = sand.u32 %s27, 1
          %s188 = scalar_lea.sflag [#allocation3], %s187
          %s189 = sand.u32 %s27, 1
          %s190 = smul.addr %s189, 12
          %s191 = scalar_lea.vmem [#allocation2], %s190
          %s193 = ssub.s32 192, 192
          %194 = vsyncadd %s188, %s193
          %s195 = smul.addr %s17, 3
          %s196 = smul.addr %s195, 64
          %s197 = scalar_lea.hbm %s0, %s196
          %s199 = sshll.u32 %s191, 4
          %s200 = int_to_ptr.vmem [resolvable:$true] %s199
          %202 = dma.hbm_to_vmem [thread:$0]  %s197, 192, %s200, %s188
        $region36: #{tpu_custom_call.1} parent=31 // pred_fallthru
          _
      $region32: #{tpu_custom_call.1} parent=5 // pred_fallthru
        _
      %p203 = scmp.le.s32.totalorder 1, %s17
      %p204 = scmp.lt.s32.totalorder %s17, 3
      %p205 = pnand %p203, %p204
      %p206 = pneg %p205
      // Predicated region
      $region37: #{tpu_custom_call.1} parent=5 // pred_check
        _
      $region38: #{tpu_custom_call.1} parent=5 // pred_check_branch
        %208 = sbr.rel (%p205) target = $region40
      $region39: #{tpu_custom_call.1} parent=5 // pred_region
        %s209 = ssub.s32 %s17, 1
        %s210 = sand.u32 %s30, 1
        %s211 = scalar_lea.sflag [#allocation3], %s210
        %s212 = sand.u32 %s30, 1
        %s213 = smul.addr %s212, 12
        %s214 = scalar_lea.vmem [#allocation2], %s213
        // Predicated region
        $region41: #{tpu_custom_call.1} parent=39 // pred_check
          %p215 = pneg %p43
        $region42: #{tpu_custom_call.1} parent=39 // pred_check_branch
          %217 = sbr.rel (%p215) target = $region44
        $region43: #{tpu_custom_call.1} parent=39 // pred_region
          %218 = dma.done %s211, 192
        $region44: #{tpu_custom_call.1} parent=39 // pred_fallthru
          _
        %s219 = sand.u32 %s30, 1
        %s220 = scalar_lea.sflag [#allocation3], %s219
        %s221 = sand.u32 %s30, 1
        %s222 = smul.addr %s221, 12
        %s223 = scalar_lea.vmem [#allocation2], %s222
        %p224 = pneg %p43
        %p225 = pneg %p40
        %p226 = pneg %p64
        %p227 = pneg %p61
        %p228 = pneg %p85
        %p229 = pneg %p82
        %p230 = pneg %p106
        %p231 = pneg %p103
        %p232 = pneg %p127
        %p233 = pneg %p124
        %p234 = pneg %p153
        %p235 = pneg %p150
        %s236 = sand.u32 %s140, 1
        %s237 = scalar_lea.sflag [#allocation4], %s236
        %s238 = sand.u32 %s140, 1
        %s239 = smul.addr %s238, 6
        %s240 = scalar_lea.vmem [#allocation5], %s239
        %v241 = vld [vmem:[%s214] sm:$0xff]
        %v242 = vld [vmem:[%s214 + $0x8] sm:$0xf]
        %v245 = vcombine.high %v241, %v241
        %v247 = vcombine.low %v241, %v241
        %v248 = vcombine.low %v242, %v242
        %249 = vrot.lane.b32.xlu0 %v247, 127
        %v250 = vpop.permute.xlu0 %249
        %251 = vrot.lane.b32.xlu0 %v241, 127
        %v252 = vpop.permute.xlu0 %251
        %253 = vrot.lane.b32.xlu0 %v248, 127
        %v254 = vpop.permute.xlu0 %253
        %vm255 = vcmask 1039360
        %v256 = vsel %vm255, %v250, %v252
        %v257 = vsel %vm255, %v252, %v254
        %261 = vrot.lane.b32.xlu0 %v241, 126
        %v262 = vpop.permute.xlu0 %261
        %263 = vrot.lane.b32.xlu0 %v245, 126
        %v264 = vpop.permute.xlu0 %263
        %265 = vrot.lane.b32.xlu0 %v242, 126
        %v266 = vpop.permute.xlu0 %265
        %vm267 = vcmask 1031168
        %v268 = vsel %vm267, %v262, %v264
        %v269 = vsel %vm267, %v264, %v266
        %273 = vrot.lane.b32.xlu0 %v247, 110
        %v274 = vpop.permute.xlu0 %273
        %275 = vrot.lane.b32.xlu0 %v241, 110
        %v276 = vpop.permute.xlu0 %275
        %277 = vrot.lane.b32.xlu0 %v248, 110
        %v278 = vpop.permute.xlu0 %277
        %vm279 = vcmask 900096
        %v280 = vsel %vm279, %v274, %v276
        %v281 = vsel %vm279, %v276, %v278
        %285 = vrot.lane.b32.xlu0 %v241, 109
        %v286 = vpop.permute.xlu0 %285
        %287 = vrot.lane.b32.xlu0 %v245, 109
        %v288 = vpop.permute.xlu0 %287
        %289 = vrot.lane.b32.xlu0 %v242, 109
        %v290 = vpop.permute.xlu0 %289
        %vm291 = vcmask 891904
        %v292 = vsel %vm291, %v286, %v288
        %v293 = vsel %vm291, %v288, %v290
        %297 = vrot.lane.b32.xlu0 %v247, 108
        %v298 = vpop.permute.xlu0 %297
        %299 = vrot.lane.b32.xlu0 %v241, 108
        %v300 = vpop.permute.xlu0 %299
        %301 = vrot.lane.b32.xlu0 %v248, 108
        %v302 = vpop.permute.xlu0 %301
        %vm303 = vcmask 883712
        %v304 = vsel %vm303, %v298, %v300
        %v305 = vsel %vm303, %v300, %v302
        %309 = vrot.lane.b32.xlu0 %v241, 92
        %v310 = vpop.permute.xlu0 %309
        %311 = vrot.lane.b32.xlu0 %v245, 92
        %v312 = vpop.permute.xlu0 %311
        %313 = vrot.lane.b32.xlu0 %v242, 92
        %v314 = vpop.permute.xlu0 %313
        %vm315 = vcmask 752640
        %v316 = vsel %vm315, %v310, %v312
        %v317 = vsel %vm315, %v312, %v314
        %321 = vrot.lane.b32.xlu0 %v247, 91
        %v322 = vpop.permute.xlu0 %321
        %323 = vrot.lane.b32.xlu0 %v241, 91
        %v324 = vpop.permute.xlu0 %323
        %325 = vrot.lane.b32.xlu0 %v248, 91
        %v326 = vpop.permute.xlu0 %325
        %vm327 = vcmask 744448
        %v328 = vsel %vm327, %v322, %v324
        %v329 = vsel %vm327, %v324, %v326
        %333 = vrot.lane.b32.xlu0 %v241, 90
        %v334 = vpop.permute.xlu0 %333
        %335 = vrot.lane.b32.xlu0 %v245, 90
        %v336 = vpop.permute.xlu0 %335
        %337 = vrot.lane.b32.xlu0 %v242, 90
        %v338 = vpop.permute.xlu0 %337
        %vm339 = vcmask 736256
        %v340 = vsel %vm339, %v334, %v336
        %v341 = vsel %vm339, %v336, %v338
        %vm342 = vcmask 1043456
        %v343 = vsel %vm342, %v241, %v256
        %v344 = vsel %vm342, %v245, %v257
        %v345 = vsel %vm342, %v242, %v254
        %v346 = vsel %vm342, %v268, %v280
        %v347 = vsel %vm342, %v269, %v281
        %v348 = vsel %vm342, %v266, %v278
        %v349 = vsel %vm342, %v292, %v304
        %v350 = vsel %vm342, %v293, %v305
        %v351 = vsel %vm342, %v290, %v302
        %v352 = vsel %vm342, %v316, %v328
        %v353 = vsel %vm342, %v317, %v329
        %v354 = vsel %vm342, %v314, %v326
        %v355 = vld [vmem:[%s1] sm:$0xff]
        %v356 = vld [vmem:[%s1 + $0x8] sm:$0xff]
        %v357 = vld [vmem:[%s1 + $0x10] sm:$0xff]
        %v358 = vld [vmem:[%s1 + $0x18] sm:$0xff]
        %v359 = vld [vmem:[%s3] sm:$0xff]
        %v360 = vld [vmem:[%s3 + $0x8] sm:$0xff]
        %v361 = vld [vmem:[%s3 + $0x10] sm:$0xff]
        %v362 = vld [vmem:[%s3 + $0x18] sm:$0xff]
        %364 = vset.pattern.permute.xlu0 0
        %365 = vperm.xlu0 %364, %v359
        %v366 = vpop.permute.xlu0 %365
        %369 = vset.pattern.permute.xlu0 0
        %370 = vperm.xlu0 %369, %v360
        %v371 = vpop.permute.xlu0 %370
        %374 = vset.pattern.permute.xlu0 0
        %375 = vperm.xlu0 %374, %v361
        %v376 = vpop.permute.xlu0 %375
        %379 = vset.pattern.permute.xlu0 0
        %380 = vperm.xlu0 %379, %v362
        %v381 = vpop.permute.xlu0 %380
        %vm383 = vcmask 293888
        %v385 = vsel %vm383, %v355, 0
        %v388 = vsel %vm383, %v356, 0
        %v391 = vsel %vm383, %v357, 0
        %v394 = vsel %vm383, %v358, 0
        %v396 = vsel %vm342, %v340, 0
        %v398 = vsel %vm342, %v341, 0
        %v400 = vsel %vm342, %v338, 0
        %402 = vmatprep.subr.mxu0 %v344
        %403 = vmatpush1.msra.mxu0 %v343
        %404 = vmatprep.subr.mxu0 %v347
        %405 = vmatpush1.msra.mxu0 %v346
        %406 = vmatprep.subr.mxu0 %v350
        %407 = vmatpush1.msra.mxu0 %v349
        %408 = vmatprep.subr.mxu0 %v353
        %409 = vmatpush1.msra.mxu0 %v352
        %410 = vmatprep.subr.mxu0 %v398
        %411 = vmatpush1.msra.mxu0 %v396
        %412 = vmatprep.subr.mxu0 0.0
        %413 = vmatpush1.msra.mxu0 0.0
        %414 = vmatprep.subr.mxu0 0.0
        %415 = vmatpush1.msra.mxu0 0.0
        %416 = vmatprep.subr.mxu0 0.0
        %417 = vmatpush1.msra.mxu0 0.0
        %418 = vmatprep.subr.mxu0 0.0
        %419 = vmatpush1.msra.mxu0 0.0
        %420 = vmatprep.subr.mxu0 0.0
        %421 = vmatpush1.msra.mxu0 0.0
        %422 = vmatprep.subr.mxu0 0.0
        %423 = vmatpush1.msra.mxu0 0.0
        %424 = vmatprep.subr.mxu0 0.0
        %425 = vmatpush1.msra.mxu0 0.0
        %426 = vmatprep.subr.mxu0 0.0
        %427 = vmatpush1.msra.mxu0 0.0
        %428 = vmatprep.subr.mxu0 0.0
        %429 = vmatpush1.msra.mxu0 0.0
        %430 = vmatprep.subr.mxu0 0.0
        %431 = vmatpush1.msra.mxu0 0.0
        %432 = vmatprep.subr.mxu0 0.0
        %433 = vmatpush1.msra.mxu0 0.0
        %434 = vmatprep.subr.mxu0 0.0
        %435 = vmatpush1.msra.mxu0 0.0
        %436 = vmatprep.subr.mxu0 0.0
        %437 = vmatpush1.msra.mxu0 0.0
        %438 = vmatprep.subr.mxu0 0.0
        %439 = vmatpush1.msra.mxu0 0.0
        %440 = vmatprep.subr.mxu0 0.0
        %441 = vmatpush1.msra.mxu0 0.0
        %442 = vmatprep.subr.mxu0 0.0
        %443 = vmatpush1.msra.mxu0 0.0
        %444 = vmatprep.subr.mxu0 0.0
        %445 = vmatpush1.msra.mxu0 0.0
        %446 = vmatprep.subr.mxu0 0.0
        %447 = vmatpush1.msra.mxu0 0.0
        %448 = vmatprep.subr.mxu0 0.0
        %449 = vmatpush1.msra.mxu0 0.0
        %450 = vmatprep.subr.mxu0 0.0
        %451 = vmatpush1.msra.mxu0 0.0
        %452 = vmatprep.subr.mxu0 0.0
        %453 = vmatpush1.msra.mxu0 0.0
        %454 = vmatprep.subr.mxu0 0.0
        %455 = vmatpush1.msra.mxu0 0.0
        %456 = vmatprep.subr.mxu0 0.0
        %457 = vmatpush1.msra.mxu0 0.0
        %458 = vmatprep.subr.mxu0 0.0
        %459 = vmatpush1.msra.mxu0 0.0
        %460 = vmatprep.subr.mxu0 0.0
        %461 = vmatpush1.msra.mxu0 0.0
        %462 = vmatprep.subr.mxu0 0.0
        %463 = vmatpush1.msra.mxu0 0.0
        %464 = vmatprep.subr.mxu0 0.0
        %465 = vmatpush1.msra.mxu0 0.0
        %466 = vmatprep.mubr.f32.mxu0 0.0
        %467 = vmatmul.mubr.f32.gmra.mrb[0].mxu0 %v385
        %v468 = vpop.f32.mrb[0].mxu0
        %v469 = vadd.f32 %v366, %v468
        %v470 = vpop.f32.mrb[0].mxu0
        %v471 = vadd.f32 %v366, %v470
        %472 = vmatprep.mubr.f32.mxu0 0.0
        %473 = vmatmul.mubr.f32.gmra.mrb[0].mxu0 %v388
        %v474 = vpop.f32.mrb[0].mxu0
        %v475 = vadd.f32 %v371, %v474
        %v476 = vpop.f32.mrb[0].mxu0
        %v477 = vadd.f32 %v371, %v476
        %478 = vmatprep.mubr.f32.mxu0 0.0
        %479 = vmatmul.mubr.f32.gmra.mrb[0].mxu0 %v391
        %v480 = vpop.f32.mrb[0].mxu0
        %v481 = vadd.f32 %v376, %v480
        %v482 = vpop.f32.mrb[0].mxu0
        %v483 = vadd.f32 %v376, %v482
        %484 = vmatprep.mubr.f32.mxu0 0.0
        %485 = vmatmul.mubr.f32.gmra.mrb[0].mxu0 %v394
        %v486 = vpop.f32.mrb[0].mxu0
        %v487 = vadd.f32 %v381, %v486
        %v488 = vpop.f32.mrb[0].mxu0
        %v489 = vadd.f32 %v381, %v488
        %490 = vdwg.mxu0
        %491 = vmatprep.subr.mxu0 0.0
        %492 = vmatpush1.msra.mxu0 %v345
        %493 = vmatprep.subr.mxu0 0.0
        %494 = vmatpush1.msra.mxu0 %v348
        %495 = vmatprep.subr.mxu0 0.0
        %496 = vmatpush1.msra.mxu0 %v351
        %497 = vmatprep.subr.mxu0 0.0
        %498 = vmatpush1.msra.mxu0 %v354
        %499 = vmatprep.subr.mxu0 0.0
        %500 = vmatpush1.msra.mxu0 %v400
        %501 = vmatprep.subr.mxu0 0.0
        %502 = vmatpush1.msra.mxu0 0.0
        %503 = vmatprep.subr.mxu0 0.0
        %504 = vmatpush1.msra.mxu0 0.0
        %505 = vmatprep.subr.mxu0 0.0
        %506 = vmatpush1.msra.mxu0 0.0
        %507 = vmatprep.subr.mxu0 0.0
        %508 = vmatpush1.msra.mxu0 0.0
        %509 = vmatprep.subr.mxu0 0.0
        %510 = vmatpush1.msra.mxu0 0.0
        %511 = vmatprep.subr.mxu0 0.0
        %512 = vmatpush1.msra.mxu0 0.0
        %513 = vmatprep.subr.mxu0 0.0
        %514 = vmatpush1.msra.mxu0 0.0
        %515 = vmatprep.subr.mxu0 0.0
        %516 = vmatpush1.msra.mxu0 0.0
        %517 = vmatprep.subr.mxu0 0.0
        %518 = vmatpush1.msra.mxu0 0.0
        %519 = vmatprep.subr.mxu0 0.0
        %520 = vmatpush1.msra.mxu0 0.0
        %521 = vmatprep.subr.mxu0 0.0
        %522 = vmatpush1.msra.mxu0 0.0
        %523 = vmatprep.subr.mxu0 0.0
        %524 = vmatpush1.msra.mxu0 0.0
        %525 = vmatprep.subr.mxu0 0.0
        %526 = vmatpush1.msra.mxu0 0.0
        %527 = vmatprep.subr.mxu0 0.0
        %528 = vmatpush1.msra.mxu0 0.0
        %529 = vmatprep.subr.mxu0 0.0
        %530 = vmatpush1.msra.mxu0 0.0
        %531 = vmatprep.subr.mxu0 0.0
        %532 = vmatpush1.msra.mxu0 0.0
        %533 = vmatprep.subr.mxu0 0.0
        %534 = vmatpush1.msra.mxu0 0.0
        %535 = vmatprep.subr.mxu0 0.0
        %536 = vmatpush1.msra.mxu0 0.0
        %537 = vmatprep.subr.mxu0 0.0
        %538 = vmatpush1.msra.mxu0 0.0
        %539 = vmatprep.subr.mxu0 0.0
        %540 = vmatpush1.msra.mxu0 0.0
        %541 = vmatprep.subr.mxu0 0.0
        %542 = vmatpush1.msra.mxu0 0.0
        %543 = vmatprep.subr.mxu0 0.0
        %544 = vmatpush1.msra.mxu0 0.0
        %545 = vmatprep.subr.mxu0 0.0
        %546 = vmatpush1.msra.mxu0 0.0
        %547 = vmatprep.subr.mxu0 0.0
        %548 = vmatpush1.msra.mxu0 0.0
        %549 = vmatprep.subr.mxu0 0.0
        %550 = vmatpush1.msra.mxu0 0.0
        %551 = vmatprep.subr.mxu0 0.0
        %552 = vmatpush1.msra.mxu0 0.0
        %553 = vmatprep.subr.mxu0 0.0
        %554 = vmatpush1.msra.mxu0 0.0
        %555 = vmatprep.mubr.f32.mxu0 0.0
        %556 = vmatmul.mubr.f32.gmra.mrb[0].mxu0 %v385
        %v557 = vpop.f32.mrb[0].mxu0
        %v558 = vadd.f32 %v366, %v557
        %v559 = vpop.f32.mrb[0].mxu0
        %560 = vmatprep.mubr.f32.mxu0 0.0
        %561 = vmatmul.mubr.f32.gmra.mrb[0].mxu0 %v388
        %v562 = vpop.f32.mrb[0].mxu0
        %v563 = vadd.f32 %v371, %v562
        %v564 = vpop.f32.mrb[0].mxu0
        %565 = vmatprep.mubr.f32.mxu0 0.0
        %566 = vmatmul.mubr.f32.gmra.mrb[0].mxu0 %v391
        %v567 = vpop.f32.mrb[0].mxu0
        %v568 = vadd.f32 %v376, %v567
        %v569 = vpop.f32.mrb[0].mxu0
        %570 = vmatprep.mubr.f32.mxu0 0.0
        %571 = vmatmul.mubr.f32.gmra.mrb[0].mxu0 %v394
        %v572 = vpop.f32.mrb[0].mxu0
        %v573 = vadd.f32 %v381, %v572
        %v574 = vpop.f32.mrb[0].mxu0
        %575 = vdwg.mxu0
        %v576 = vmax.f32 %v469, 0.0
        %v577 = vmax.f32 %v471, 0.0
        %v578 = vmax.f32 %v558, 0.0
        %v579 = vmax.f32 %v475, 0.0
        %v580 = vmax.f32 %v477, 0.0
        %v581 = vmax.f32 %v563, 0.0
        %v582 = vmax.f32 %v481, 0.0
        %v583 = vmax.f32 %v483, 0.0
        %v584 = vmax.f32 %v568, 0.0
        %v585 = vmax.f32 %v487, 0.0
        %v586 = vmax.f32 %v489, 0.0
        %v587 = vmax.f32 %v573, 0.0
        %v588 = vld [vmem:[%s2] sm:$0x3]
        %v589 = vld [vmem:[%s4] sm:$0x3]
        %591 = vset.pattern.permute.xlu0 0
        %592 = vperm.xlu0 %591, %v589
        %v593 = vpop.permute.xlu0 %592
        %vm595 = vcmask 261120
        %v597 = vsel %vm595, %v588, 0
        %599 = vmatprep.subr.mxu0 %v577
        %600 = vmatpush1.msra.mxu0 %v576
        %601 = vmatprep.subr.mxu0 %v580
        %602 = vmatpush1.msra.mxu0 %v579
        %603 = vmatprep.subr.mxu0 %v583
        %604 = vmatpush1.msra.mxu0 %v582
        %605 = vmatprep.subr.mxu0 %v586
        %606 = vmatpush1.msra.mxu0 %v585
        %607 = vmatprep.subr.mxu0 0.0
        %608 = vmatpush1.msra.mxu0 0.0
        %609 = vmatprep.subr.mxu0 0.0
        %610 = vmatpush1.msra.mxu0 0.0
        %611 = vmatprep.subr.mxu0 0.0
        %612 = vmatpush1.msra.mxu0 0.0
        %613 = vmatprep.subr.mxu0 0.0
        %614 = vmatpush1.msra.mxu0 0.0
        %615 = vmatprep.subr.mxu0 0.0
        %616 = vmatpush1.msra.mxu0 0.0
        %617 = vmatprep.subr.mxu0 0.0
        %618 = vmatpush1.msra.mxu0 0.0
        %619 = vmatprep.subr.mxu0 0.0
        %620 = vmatpush1.msra.mxu0 0.0
        %621 = vmatprep.subr.mxu0 0.0
        %622 = vmatpush1.msra.mxu0 0.0
        %623 = vmatprep.subr.mxu0 0.0
        %624 = vmatpush1.msra.mxu0 0.0
        %625 = vmatprep.subr.mxu0 0.0
        %626 = vmatpush1.msra.mxu0 0.0
        %627 = vmatprep.subr.mxu0 0.0
        %628 = vmatpush1.msra.mxu0 0.0
        %629 = vmatprep.subr.mxu0 0.0
        %630 = vmatpush1.msra.mxu0 0.0
        %631 = vmatprep.subr.mxu0 0.0
        %632 = vmatpush1.msra.mxu0 0.0
        %633 = vmatprep.subr.mxu0 0.0
        %634 = vmatpush1.msra.mxu0 0.0
        %635 = vmatprep.subr.mxu0 0.0
        %636 = vmatpush1.msra.mxu0 0.0
        %637 = vmatprep.subr.mxu0 0.0
        %638 = vmatpush1.msra.mxu0 0.0
        %639 = vmatprep.subr.mxu0 0.0
        %640 = vmatpush1.msra.mxu0 0.0
        %641 = vmatprep.subr.mxu0 0.0
        %642 = vmatpush1.msra.mxu0 0.0
        %643 = vmatprep.subr.mxu0 0.0
        %644 = vmatpush1.msra.mxu0 0.0
        %645 = vmatprep.subr.mxu0 0.0
        %646 = vmatpush1.msra.mxu0 0.0
        %647 = vmatprep.subr.mxu0 0.0
        %648 = vmatpush1.msra.mxu0 0.0
        %649 = vmatprep.subr.mxu0 0.0
        %650 = vmatpush1.msra.mxu0 0.0
        %651 = vmatprep.subr.mxu0 0.0
        %652 = vmatpush1.msra.mxu0 0.0
        %653 = vmatprep.subr.mxu0 0.0
        %654 = vmatpush1.msra.mxu0 0.0
        %655 = vmatprep.subr.mxu0 0.0
        %656 = vmatpush1.msra.mxu0 0.0
        %657 = vmatprep.subr.mxu0 0.0
        %658 = vmatpush1.msra.mxu0 0.0
        %659 = vmatprep.subr.mxu0 0.0
        %660 = vmatpush1.msra.mxu0 0.0
        %661 = vmatprep.subr.mxu0 0.0
        %662 = vmatpush1.msra.mxu0 0.0
        %663 = vmatprep.mubr.f32.mxu0 0.0
        %664 = vmatmul.mubr.f32.gmra.mrb[0].mxu0 %v597
        %v665 = vpop.f32.mrb[0].mxu0
        %v666 = vadd.f32 %v593, %v665
        %v667 = vpop.f32.mrb[0].mxu0
        %v668 = vadd.f32 %v593, %v667
        %669 = vdwg.mxu0
        %670 = vmatprep.subr.mxu0 0.0
        %671 = vmatpush1.msra.mxu0 %v578
        %672 = vmatprep.subr.mxu0 0.0
        %673 = vmatpush1.msra.mxu0 %v581
        %674 = vmatprep.subr.mxu0 0.0
        %675 = vmatpush1.msra.mxu0 %v584
        %676 = vmatprep.subr.mxu0 0.0
        %677 = vmatpush1.msra.mxu0 %v587
        %678 = vmatprep.subr.mxu0 0.0
        %679 = vmatpush1.msra.mxu0 0.0
        %680 = vmatprep.subr.mxu0 0.0
        %681 = vmatpush1.msra.mxu0 0.0
        %682 = vmatprep.subr.mxu0 0.0
        %683 = vmatpush1.msra.mxu0 0.0
        %684 = vmatprep.subr.mxu0 0.0
        %685 = vmatpush1.msra.mxu0 0.0
        %686 = vmatprep.subr.mxu0 0.0
        %687 = vmatpush1.msra.mxu0 0.0
        %688 = vmatprep.subr.mxu0 0.0
        %689 = vmatpush1.msra.mxu0 0.0
        %690 = vmatprep.subr.mxu0 0.0
        %691 = vmatpush1.msra.mxu0 0.0
        %692 = vmatprep.subr.mxu0 0.0
        %693 = vmatpush1.msra.mxu0 0.0
        %694 = vmatprep.subr.mxu0 0.0
        %695 = vmatpush1.msra.mxu0 0.0
        %696 = vmatprep.subr.mxu0 0.0
        %697 = vmatpush1.msra.mxu0 0.0
        %698 = vmatprep.subr.mxu0 0.0
        %699 = vmatpush1.msra.mxu0 0.0
        %700 = vmatprep.subr.mxu0 0.0
        %701 = vmatpush1.msra.mxu0 0.0
        %702 = vmatprep.subr.mxu0 0.0
        %703 = vmatpush1.msra.mxu0 0.0
        %704 = vmatprep.subr.mxu0 0.0
        %705 = vmatpush1.msra.mxu0 0.0
        %706 = vmatprep.subr.mxu0 0.0
        %707 = vmatpush1.msra.mxu0 0.0
        %708 = vmatprep.subr.mxu0 0.0
        %709 = vmatpush1.msra.mxu0 0.0
        %710 = vmatprep.subr.mxu0 0.0
        %711 = vmatpush1.msra.mxu0 0.0
        %712 = vmatprep.subr.mxu0 0.0
        %713 = vmatpush1.msra.mxu0 0.0
        %714 = vmatprep.subr.mxu0 0.0
        %715 = vmatpush1.msra.mxu0 0.0
        %716 = vmatprep.subr.mxu0 0.0
        %717 = vmatpush1.msra.mxu0 0.0
        %718 = vmatprep.subr.mxu0 0.0
        %719 = vmatpush1.msra.mxu0 0.0
        %720 = vmatprep.subr.mxu0 0.0
        %721 = vmatpush1.msra.mxu0 0.0
        %722 = vmatprep.subr.mxu0 0.0
        %723 = vmatpush1.msra.mxu0 0.0
        %724 = vmatprep.subr.mxu0 0.0
        %725 = vmatpush1.msra.mxu0 0.0
        %726 = vmatprep.subr.mxu0 0.0
        %727 = vmatpush1.msra.mxu0 0.0
        %728 = vmatprep.subr.mxu0 0.0
        %729 = vmatpush1.msra.mxu0 0.0
        %730 = vmatprep.subr.mxu0 0.0
        %731 = vmatpush1.msra.mxu0 0.0
        %732 = vmatprep.subr.mxu0 0.0
        %733 = vmatpush1.msra.mxu0 0.0
        %734 = vmatprep.mubr.f32.mxu0 0.0
        %735 = vmatmul.mubr.f32.gmra.mrb[0].mxu0 %v597
        %v736 = vpop.f32.mrb[0].mxu0
        %v737 = vadd.f32 %v593, %v736
        %v738 = vpop.f32.mrb[0].mxu0
        %739 = vdwg.mxu0
        %v743 = vcombine.low %v666, %v668
        %v745 = vunpack.c.l.s4 1983009808
        %v746 = vunpack.c.0.s8 %v745
        %v747 = vlaneseq
        %v748 = vshrl.u32 %v747, 7
        %v749 = vsub.s32 %v746, %v748
        %v750 = vrot.slane %v743, %v749
        %v752 = vunpack.c.l.s4 1983009808
        %v753 = vunpack.c.0.s8 %v752
        %v754 = vlaneseq
        %v755 = vshrl.u32 %v754, 7
        %v756 = vsub.s32 %v753, %v755
        %v757 = vrot.slane %v737, %v756
        %v758 = vcombine.low %v750, %v757
        %vm760 = vcmask 1041408
        %vm761 = vcmask 1043458
        %vm762 = vmor %vm761, %vm760
        %vm763 = vcmask 259076
        %vm764 = vmor %vm763, %vm762
        %765 = vst.msk [vmem:[%s240] sm:$0x3f] %vm764, %v758
        %s766 = sand.u32 %s140, 1
        %s767 = scalar_lea.sflag [#allocation4], %s766
        %s768 = sand.u32 %s140, 1
        %s769 = smul.addr %s768, 6
        %s770 = scalar_lea.vmem [#allocation5], %s769
        // Predicated region
        $region45: #{tpu_custom_call.1} parent=39 // pred_check
          %p771 = pneg %p150
        $region46: #{tpu_custom_call.1} parent=39 // pred_check_branch
          %773 = sbr.rel (%p771) target = $region48
        $region47: #{tpu_custom_call.1} parent=39 // pred_region
          %s775 = ssub.s32 96, 96
          %776 = vsyncadd %s767, %s775
          %s777 = smul.addr %s22, 3
          %s778 = smul.addr %s777, 32
          %s779 = scalar_lea.hbm %s5, %s778
          %s781 = sshll.u32 %s770, 4
          %s782 = int_to_ptr.vmem [resolvable:$true] %s781
          %784 = dma.vmem_to_hbm [thread:$0]  %s782, 96, %s779, %s767
        $region48: #{tpu_custom_call.1} parent=39 // pred_fallthru
          _
      $region40: #{tpu_custom_call.1} parent=5 // pred_fallthru
        _
      %p785 = scmp.le.s32.totalorder 2, %s17
      // Predicated region
      $region49: #{tpu_custom_call.1} parent=5 // pred_check
        %p786 = pneg %p785
      $region50: #{tpu_custom_call.1} parent=5 // pred_check_branch
        %788 = sbr.rel (%p786) target = $region52
      $region51: #{tpu_custom_call.1} parent=5 // pred_region
        %s789 = ssub.s32 %s17, 2
        // Predicated region
        $region53: #{tpu_custom_call.1} parent=51 // pred_check
          %p790 = pneg %p156
        $region54: #{tpu_custom_call.1} parent=51 // pred_check_branch
          %792 = sbr.rel (%p790) target = $region56
        $region55: #{tpu_custom_call.1} parent=51 // pred_region
          %s793 = sand.u32 %s141, 1
          %s794 = scalar_lea.sflag [#allocation4], %s793
          %s795 = sand.u32 %s141, 1
          %s796 = smul.addr %s795, 6
          %s797 = scalar_lea.vmem [#allocation5], %s796
          %798 = dma.done %s794, 96
        $region56: #{tpu_custom_call.1} parent=51 // pred_fallthru
          _
      $region52: #{tpu_custom_call.1} parent=5 // pred_fallthru
        _
    $region6: #{tpu_custom_call.1} parent=1 // loop_footer
      %s21 = sadd.s32 1, %s17
    $region7: #{tpu_custom_call.1} parent=1 // loop_footer_branch
      %16 = sbr.rel target = $region3
    $region8: #{tpu_custom_call.1} parent=1 // loop_exit
      _
    %799 = vsyncpa [#allocation3], 1
    %s800 = scalar_lea.sflag [#allocation3], 1
    %801 = vsyncpa %s800, 1
    %802 = vsyncpa [#allocation4], 1
    %s803 = scalar_lea.sflag [#allocation4], 1
    %804 = vsyncpa %s803, 1

</llo_original>
